<compile_context>
chip_gen: v5e
topology: v5e:2x2
jax: 0.10.0
libtpu: 0.0.40
codegen_flags: <defaults>
</compile_context>

<pallas_src>
import jax
import jax.numpy as jnp
from jax import lax
from jax.experimental import pallas as pl
from jax.experimental.pallas import tpu as pltpu


def _round_up(x: int, m: int) -> int:
    return (x + m - 1) // m * m


def _vmem_capacity_bytes() -> int:
    """Physical VMEM per TensorCore; conservative (v7x-like) fallback."""
    try:
        info = pltpu.get_tpu_info()
        cap = getattr(info, "vmem_capacity_bytes", None)
        if cap:
            return int(cap)
    except Exception:
        pass
    return 64 * 1024 * 1024


def _select_tiles(N: int, M: int, isz_min: int, isz_sum: int):
    """Pick (tn, tm).

    tn: multiple of the sublane packing (8 f32 / 16 bf16 / 32 int8), capped so the
        parallel row axis has >= 2 programs whenever N allows it (megacore).
    tm: multiple of 128, as large as the double-buffered 2-input VMEM budget
        allows, capped at 4096 lanes (v7x-safe per the review).
    """
    sub = max(8, 32 // max(1, isz_min))
    lane = 128

    vmem_cap = _vmem_capacity_bytes()
    # Budget for the pipelined input buffers: 2 inputs x 2 buffers.
    in_budget = min(vmem_cap // 3, 40 * 1024 * 1024)  # ~21MiB v7x, 40MiB v5e/v6e

    tn_max = 512 if in_budget >= 32 * 1024 * 1024 else 256
    tn = min(tn_max, _round_up(N, sub))
    if N > sub:  # keep >= 2 programs on the parallel row axis for megacore
        tn = min(tn, _round_up(pl.cdiv(N, 2), sub))
    tn = max(tn, sub)

    per_lane_bytes = 2 * tn * isz_sum  # 2 buffers x (pred+target) per lane column
    tm_budget = max(lane, (in_budget // per_lane_bytes) // lane * lane)
    tm = min(4096, _round_up(M, lane), tm_budget)
    return tn, tm


def _make_dice_partial_kernel(M: int, tm: int, k_per_split: int, p: int,
                              need_mask: bool):
    def kernel(pred_ref, tgt_ref, inter_out, union_out, inter_acc, union_acc):
        k = pl.program_id(2)  # innermost lane-reduction axis

        @pl.when(k == 0)
        def _init():
            inter_acc[...] = jnp.zeros_like(inter_acc)
            union_acc[...] = jnp.zeros_like(union_acc)

        x = pred_ref[...].astype(jnp.float32)
        y = tgt_ref[...].astype(jnp.float32)

        if need_mask:
            # Mask the remainder lane tile (and any fully-out-of-range split
            # step) BEFORE the mul/pow so garbage VMEM lanes contribute 0.
            s = pl.program_id(0)
            col0 = (s * k_per_split + k) * tm
            cols = col0 + lax.broadcasted_iota(jnp.int32, x.shape, 1)
            valid = cols < M
            x = jnp.where(valid, x, 0.0)
            y = jnp.where(valid, y, 0.0)

        inter_acc[...] += jnp.sum(x * y, axis=1, keepdims=True)
        if p == 2:
            pw = x * x + y * y
        elif p == 1:
            pw = x + y
        else:
            pw = jnp.power(x, p) + jnp.power(y, p)
        union_acc[...] += jnp.sum(pw, axis=1, keepdims=True)

        @pl.when(k == pl.num_programs(2) - 1)
        def _emit():
            inter_out[...] = inter_acc[...]
            union_out[...] = union_acc[...]

    return kernel


def binary_dice_loss(predict, target, smooth=1e-07, p=2, reduction="mean"):
    """predict, target: [B, C, H, W]. Matches BinaryDiceLoss.forward of the spec."""
    assert predict.shape == target.shape, (
        f"predict {predict.shape} & target {target.shape} do not match")
    B, C, H, W = predict.shape
    N, M = B * C, H * W

    pred2d = predict.reshape(N, M)
    tgt2d = target.reshape(N, M)

    isz_p = jnp.dtype(pred2d.dtype).itemsize
    isz_t = jnp.dtype(tgt2d.dtype).itemsize
    tn, tm = _select_tiles(N, M, min(isz_p, isz_t), isz_p + isz_t)

    R = pl.cdiv(N, tn)          # parallel row blocks
    K = pl.cdiv(M, tm)          # lane-reduction blocks
    # Lane-reduction split: give megacore >= 2 parallel programs when the row
    # axis cannot (small B*C). Each split emits partial (inter, union) sums.
    S = 2 if (R == 1 and K >= 2) else 1
    k_per_split = pl.cdiv(K, S)
    # Mask whenever the nominal split coverage exceeds the true M (remainder
    # lane tile and/or an odd-K phantom step of the second split).
    need_mask = (S * k_per_split * tm) != M

    kernel = _make_dice_partial_kernel(M, tm, k_per_split, int(p), need_mask)

    def in_map(s, r, k):
        # Clamp so a phantom step (odd K with S=2) never indexes past the array;
        # its contribution is fully masked away in-kernel anyway.
        return (r, jnp.minimum(s * k_per_split + k, K - 1))

    def out_map(s, r, k):
        return (s, r, 0)

    in_bytes = 2 * tn * tm * (isz_p + isz_t)  # double-buffered input footprint
    vmem_limit = max(32 * 1024 * 1024, in_bytes + 8 * 1024 * 1024)

    cost = pl.CostEstimate(
        flops=6 * N * M,
        transcendentals=0,
        bytes_accessed=N * M * (isz_p + isz_t) + S * N * 2 * 4,
    )

    inter_part, union_part = pl.pallas_call(
        kernel,
        out_shape=(
            jax.ShapeDtypeStruct((S, N, 1), jnp.float32),
            jax.ShapeDtypeStruct((S, N, 1), jnp.float32),
        ),
        grid_spec=pltpu.PrefetchScalarGridSpec(
            num_scalar_prefetch=0,
            grid=(S, R, k_per_split),
            in_specs=[
                pl.BlockSpec((tn, tm), in_map),
                pl.BlockSpec((tn, tm), in_map),
            ],
            out_specs=[
                pl.BlockSpec((None, tn, 1), out_map),
                pl.BlockSpec((None, tn, 1), out_map),
            ],
            scratch_shapes=[
                pltpu.VMEM((tn, 1), jnp.float32),  # intersection accumulator
                pltpu.VMEM((tn, 1), jnp.float32),  # union accumulator
            ],
        ),
        compiler_params=pltpu.CompilerParams(
            dimension_semantics=("parallel", "parallel", "arbitrary"),
            vmem_limit_bytes=int(vmem_limit),
        ),
        cost_estimate=cost,
    )(pred2d, tgt2d)

    # Tiny epilogue on (N,)-sized data: combine splits, form the dice loss.
    inter = jnp.sum(inter_part[:, :, 0], axis=0)
    union = jnp.sum(union_part[:, :, 0], axis=0)
    loss = 1.0 - (2.0 * inter + smooth) / (union + smooth)

    if reduction == "mean":
        return jnp.mean(loss)
    elif reduction == "sum":
        return jnp.sum(loss)
    elif reduction == "none":
        return loss
    else:
        raise Exception(f"Unexpected reduction {reduction}")


def binary_dice_loss_ref(predict, target, smooth=1e-07, p=2, reduction="mean"):
    B, C, H, W = predict.shape
    pred2d = predict.reshape(B * C, H * W).astype(jnp.float32)
    tgt2d = target.reshape(B * C, H * W).astype(jnp.float32)
    intersection = 2.0 * jnp.sum(pred2d * tgt2d, axis=1) + smooth
    union = jnp.sum(pred2d ** p + tgt2d ** p, axis=1) + smooth
    loss = 1.0 - intersection / union
    if reduction == "mean":
        return jnp.mean(loss)
    elif reduction == "sum":
        return jnp.sum(loss)
    return loss


if __name__ == "__main__":
    def check(pred, tgt, rtol=1e-5, atol=1e-6, **kw):
        out = jax.block_until_ready(binary_dice_loss(pred, tgt, **kw))
        ref = binary_dice_loss_ref(pred, tgt, **kw)
        assert jnp.allclose(out, ref, rtol=rtol, atol=atol), (kw, out, ref)

    k1, k2, k3, k4 = jax.random.split(jax.random.PRNGKey(0), 4)

    # Case 1: aligned small shape (B, C, H, W) = (2, 4, 16, 16); all reductions.
    p1 = jax.nn.sigmoid(jax.random.normal(k1, (2, 4, 16, 16), jnp.float32))
    t1 = (jax.random.uniform(k2, (2, 4, 16, 16)) > 0.5).astype(jnp.float32)
    check(p1, t1)
    check(p1, t1, reduction="sum")
    check(p1, t1, reduction="none")

    # Case 2: non-128-multiple spatial size -> in-kernel lane-mask path.
    p2 = jax.nn.sigmoid(jax.random.normal(k3, (2, 3, 10, 12), jnp.float32))
    t2 = (jax.random.uniform(k4, (2, 3, 10, 12)) > 0.5).astype(jnp.float32)
    check(p2, t2)

    # Case 3: bf16 inputs, small B*C with larger spatial -> exercises the S=2
    # lane split (megacore) plus remainder masking; f32 in-kernel accumulation.
    k5, k6 = jax.random.split(jax.random.PRNGKey(1))
    p3 = jax.nn.sigmoid(
        jax.random.normal(k5, (2, 4, 72, 72), jnp.float32)).astype(jnp.bfloat16)
    t3 = (jax.random.uniform(k6, (2, 4, 72, 72)) > 0.5).astype(jnp.bfloat16)
    check(p3, t3, rtol=1e-4, atol=1e-5)

    print("KERNEL_OK")
</pallas_src>

<mosaic_0001>
module attributes {stable_mosaic.version = 11 : i64} {
  func.func @kernel(%arg0: i32, %arg1: i32, %arg2: i32, %arg3: memref<8x256xf32, #tpu.memory_space<vmem>>, %arg4: memref<8x256xf32, #tpu.memory_space<vmem>>, %arg5: memref<1x8x1xf32, #tpu.memory_space<vmem>>, %arg6: memref<1x8x1xf32, #tpu.memory_space<vmem>>, %arg7: memref<8x1xf32, #tpu.memory_space<vmem>>, %arg8: memref<8x1xf32, #tpu.memory_space<vmem>>) attributes {dimension_semantics = [#tpu.dimension_semantics<parallel>, #tpu.dimension_semantics<parallel>, #tpu.dimension_semantics<arbitrary>], iteration_bounds = array<i64: 1, 1, 1>, scalar_prefetch = 0 : i64, scratch_operands = 2 : i64, tpu.core_type = #tpu.core_type<tc>, window_params = [{transform_indices = @transform_0, window_bounds = array<i64: 8, 256>}, {transform_indices = @transform_1, window_bounds = array<i64: 8, 256>}, {transform_indices = @transform_2, window_bounds = array<i64: 1, 8, 1>}, {transform_indices = @transform_3, window_bounds = array<i64: 1, 8, 1>}]} {
    %c0_i32 = arith.constant 0 : i32
    %0 = arith.cmpi eq, %arg2, %c0_i32 : i32
    %1 = arith.extui %0 : i1 to i32
    %c0_i32_0 = arith.constant 0 : i32
    %2 = arith.cmpi ne, %1, %c0_i32_0 : i32
    scf.if %2 {
      %cst_15 = arith.constant 0.000000e+00 : f32
      %22 = vector.broadcast %cst_15 : f32 to vector<8x1xf32>
      %c0_16 = arith.constant 0 : index
      %c0_17 = arith.constant 0 : index
      %23 = vector.load %arg7[%c0_16, %c0_17] : memref<8x1xf32, #tpu.memory_space<vmem>>, vector<8x1xf32>
      tpu.vector_store %arg7[%c0_16, %c0_17], %22 {strides = array<i32>} : memref<8x1xf32, #tpu.memory_space<vmem>>, vector<8x1xf32>,
      %cst_18 = arith.constant 0.000000e+00 : f32
      %24 = vector.broadcast %cst_18 : f32 to vector<8x1xf32>
      %c0_19 = arith.constant 0 : index
      %c0_20 = arith.constant 0 : index
      %25 = vector.load %arg8[%c0_19, %c0_20] : memref<8x1xf32, #tpu.memory_space<vmem>>, vector<8x1xf32>
      tpu.vector_store %arg8[%c0_19, %c0_20], %24 {strides = array<i32>} : memref<8x1xf32, #tpu.memory_space<vmem>>, vector<8x1xf32>,
    } else {
    }
    %c0 = arith.constant 0 : index
    %c0_1 = arith.constant 0 : index
    %3 = vector.load %arg3[%c0, %c0_1] : memref<8x256xf32, #tpu.memory_space<vmem>>, vector<8x256xf32>
    %c0_2 = arith.constant 0 : index
    %c0_3 = arith.constant 0 : index
    %4 = vector.load %arg4[%c0_2, %c0_3] : memref<8x256xf32, #tpu.memory_space<vmem>>, vector<8x256xf32>
    %c0_4 = arith.constant 0 : index
    %c0_5 = arith.constant 0 : index
    %5 = vector.load %arg7[%c0_4, %c0_5] : memref<8x1xf32, #tpu.memory_space<vmem>>, vector<8x1xf32>
    %6 = arith.mulf %3, %4 : vector<8x256xf32>
    %cst = arith.constant dense<0.000000e+00> : vector<8xf32>
    %7 = vector.multi_reduction <add>, %6, %cst [1] : vector<8x256xf32> to vector<8xf32>
    %8 = vector.shape_cast %7 : vector<8xf32> to vector<8x1xf32>
    %9 = arith.addf %5, %8 : vector<8x1xf32>
    %c0_6 = arith.constant 0 : index
    %c0_7 = arith.constant 0 : index
    %10 = vector.load %arg7[%c0_6, %c0_7] : memref<8x1xf32, #tpu.memory_space<vmem>>, vector<8x1xf32>
    tpu.vector_store %arg7[%c0_6, %c0_7], %9 {strides = array<i32>} : memref<8x1xf32, #tpu.memory_space<vmem>>, vector<8x1xf32>,
    %11 = arith.mulf %3, %3 : vector<8x256xf32>
    %12 = arith.mulf %4, %4 : vector<8x256xf32>
    %13 = arith.addf %11, %12 : vector<8x256xf32>
    %c0_8 = arith.constant 0 : index
    %c0_9 = arith.constant 0 : index
    %14 = vector.load %arg8[%c0_8, %c0_9] : memref<8x1xf32, #tpu.memory_space<vmem>>, vector<8x1xf32>
    %cst_10 = arith.constant dense<0.000000e+00> : vector<8xf32>
    %15 = vector.multi_reduction <add>, %13, %cst_10 [1] : vector<8x256xf32> to vector<8xf32>
    %16 = vector.shape_cast %15 : vector<8xf32> to vector<8x1xf32>
    %17 = arith.addf %14, %16 : vector<8x1xf32>
    %c0_11 = arith.constant 0 : index
    %c0_12 = arith.constant 0 : index
    %18 = vector.load %arg8[%c0_11, %c0_12] : memref<8x1xf32, #tpu.memory_space<vmem>>, vector<8x1xf32>
    tpu.vector_store %arg8[%c0_11, %c0_12], %17 {strides = array<i32>} : memref<8x1xf32, #tpu.memory_space<vmem>>, vector<8x1xf32>,
    %c0_i32_13 = arith.constant 0 : i32
    %19 = arith.cmpi eq, %arg2, %c0_i32_13 : i32
    %20 = arith.extui %19 : i1 to i32
    %c0_i32_14 = arith.constant 0 : i32
    %21 = arith.cmpi ne, %20, %c0_i32_14 : i32
    scf.if %21 {
      %c0_15 = arith.constant 0 : index
      %c0_16 = arith.constant 0 : index
      %22 = vector.load %arg7[%c0_15, %c0_16] : memref<8x1xf32, #tpu.memory_space<vmem>>, vector<8x1xf32>
      %c0_17 = arith.constant 0 : index
      %c0_18 = arith.constant 0 : index
      %c0_19 = arith.constant 0 : index
      %23 = vector.load %arg5[%c0_17, %c0_18, %c0_19] : memref<1x8x1xf32, #tpu.memory_space<vmem>>, vector<1x8x1xf32>
      %24 = vector.shape_cast %23 : vector<1x8x1xf32> to vector<8x1xf32>
      %25 = vector.shape_cast %22 : vector<8x1xf32> to vector<1x8x1xf32>
      tpu.vector_store %arg5[%c0_17, %c0_18, %c0_19], %25 {strides = array<i32>} : memref<1x8x1xf32, #tpu.memory_space<vmem>>, vector<1x8x1xf32>,
      %c0_20 = arith.constant 0 : index
      %c0_21 = arith.constant 0 : index
      %26 = vector.load %arg8[%c0_20, %c0_21] : memref<8x1xf32, #tpu.memory_space<vmem>>, vector<8x1xf32>
      %c0_22 = arith.constant 0 : index
      %c0_23 = arith.constant 0 : index
      %c0_24 = arith.constant 0 : index
      %27 = vector.load %arg6[%c0_22, %c0_23, %c0_24] : memref<1x8x1xf32, #tpu.memory_space<vmem>>, vector<1x8x1xf32>
      %28 = vector.shape_cast %27 : vector<1x8x1xf32> to vector<8x1xf32>
      %29 = vector.shape_cast %26 : vector<8x1xf32> to vector<1x8x1xf32>
      tpu.vector_store %arg6[%c0_22, %c0_23, %c0_24], %29 {strides = array<i32>} : memref<1x8x1xf32, #tpu.memory_space<vmem>>, vector<1x8x1xf32>,
    } else {
    }
    return
  }
  func.func @transform_0(%arg0: i32, %arg1: i32, %arg2: i32) -> (i32, i32) {
    %c1_i32 = arith.constant 1 : i32
    %0 = arith.muli %arg0, %c1_i32 : i32
    %1 = arith.addi %0, %arg2 : i32
    %c0_i32 = arith.constant 0 : i32
    %2 = arith.minsi %1, %c0_i32 : i32
    %c0_i32_0 = arith.constant 0 : i32
    return %arg1, %2 : i32, i32
  }
  func.func @transform_1(%arg0: i32, %arg1: i32, %arg2: i32) -> (i32, i32) {
    %c1_i32 = arith.constant 1 : i32
    %0 = arith.muli %arg0, %c1_i32 : i32
    %1 = arith.addi %0, %arg2 : i32
    %c0_i32 = arith.constant 0 : i32
    %2 = arith.minsi %1, %c0_i32 : i32
    %c0_i32_0 = arith.constant 0 : i32
    return %arg1, %2 : i32, i32
  }
  func.func @transform_2(%arg0: i32, %arg1: i32, %arg2: i32) -> (i32, i32, i32) {
    %c0_i32 = arith.constant 0 : i32
    %c0_i32_0 = arith.constant 0 : i32
    return %arg0, %arg1, %c0_i32 : i32, i32, i32
  }
  func.func @transform_3(%arg0: i32, %arg1: i32, %arg2: i32) -> (i32, i32, i32) {
    %c0_i32 = arith.constant 0 : i32
    %c0_i32_0 = arith.constant 0 : i32
    return %arg0, %arg1, %c0_i32 : i32, i32, i32
  }
}

</mosaic_0001>

<llo_original>
// kernel: tpu_custom_call.1
$region0: #{tpu_custom_call.1}
  #allocation0 [shape = 'u32[]', space=smem, size = 0x4, offset = 0x4, fixed_abs, tag = 'smem constant byte address 0x4 - core index']
  #allocation1 [shape = 'u32[72,128]{1,0:T(1,128)}', space=vmem, size = 0x9000, scoped, tag = 'internal scratch']
  #allocation2 [shape = 'f32[8,1]{1,0:T(8,128)}', space=vmem, size = 0x1000, scoped, tag = 'scratch operand']
  #allocation3 [shape = 'f32[8,1]{1,0:T(8,128)}', space=vmem, size = 0x1000, scoped, tag = 'scratch operand']
  %s0 = inlined_call_operand.hbm [shape: f32[8,256], index: 0, kind: input, shape index: {}]
  %s1 = inlined_call_operand.hbm [shape: f32[8,256], index: 1, kind: input, shape index: {}]
  %s2 = inlined_call_operand.vmem [shape: f32[1,8,1], index: 2, kind: output, shape index: {0}]
  %s3 = inlined_call_operand.vmem [shape: f32[1,8,1], index: 3, kind: output, shape index: {1}]
  %4 = xla_tuple %s2, %s3
  %s5 = sld [smem:[#allocation0]]
  $region42: #{tpu_custom_call.1} parent=0
    _
  %s7 = ssub.s32 1, %s5
  %s8 = scalar_select 0, %s7, %s5
  $region1: #{tpu_custom_call.1} parent=0
    #allocation4 [shape = 'u8[8192]{0}', space=vmem, size = 0x2000, scoped, tag = 'input window, operand 0, single buffered']
    #allocation5 [shape = 's32[1]{0}', space=sflag, size = 0x4, scoped, tag = 'scoped memory for tpu_custom_call.1']
    #allocation6 [shape = 'u8[8192]{0}', space=vmem, size = 0x2000, scoped, tag = 'input window, operand 1, single buffered']
    #allocation7 [shape = 's32[1]{0}', space=sflag, size = 0x4, scoped, tag = 'scoped memory for tpu_custom_call.1']
    %9 = vsyncpa [#allocation5], 0
    %10 = vsyncpa [#allocation7], 0
    // Predicated region
    $region2: #{tpu_custom_call.1} parent=1 // pred_check
      _
    $region3: #{tpu_custom_call.1} parent=1 // pred_check_branch
      %12 = sbr.rel (0) target = $region5
    $region4: #{tpu_custom_call.1} parent=1 // pred_region
      %s13 = sadd.s32 0, 0
      %p14 = scmp.lt.s32.totalorder %s13, 0
      %s15 = scalar_select %p14, %s13, 0
      %s16 = smul.u32 2, %s15
      %18 = vsyncadd [#allocation5], 0
      %s19 = smul.addr %s16, 8
      %s20 = scalar_lea.hbm %s0, %s19
      %s22 = sshll.u32 %s20, 4
      %s23 = int_to_ptr.hbm [resolvable:$true] %s22
      %s24 = sshll.u32 [#allocation4], 4
      %s25 = int_to_ptr.vmem [resolvable:$true] %s24
      %27 = dma.hbm_to_vmem [thread:$0]  %s23, 256, %s25, [#allocation5]
    $region5: #{tpu_custom_call.1} parent=1 // pred_fallthru
      _
    // Predicated region
    $region6: #{tpu_custom_call.1} parent=1 // pred_check
      _
    $region7: #{tpu_custom_call.1} parent=1 // pred_check_branch
      %29 = sbr.rel (0) target = $region9
    $region8: #{tpu_custom_call.1} parent=1 // pred_region
      %s30 = sadd.s32 0, 0
      %p31 = scmp.lt.s32.totalorder %s30, 0
      %s32 = scalar_select %p31, %s30, 0
      %s33 = smul.u32 2, %s32
      %35 = vsyncadd [#allocation7], 0
      %s36 = smul.addr %s33, 8
      %s37 = scalar_lea.hbm %s1, %s36
      %s39 = sshll.u32 %s37, 4
      %s40 = int_to_ptr.hbm [resolvable:$true] %s39
      %s41 = sshll.u32 [#allocation6], 4
      %s42 = int_to_ptr.vmem [resolvable:$true] %s41
      %44 = dma.hbm_to_vmem [thread:$0]  %s40, 256, %s42, [#allocation7]
    $region9: #{tpu_custom_call.1} parent=1 // pred_fallthru
      _
    // Predicated region
    $region10: #{tpu_custom_call.1} parent=1 // pred_check
      _
    $region11: #{tpu_custom_call.1} parent=1 // pred_check_branch
      %46 = sbr.rel (0) target = $region13
    $region12: #{tpu_custom_call.1} parent=1 // pred_region
      %48 = dma.done [#allocation5], 256
    $region13: #{tpu_custom_call.1} parent=1 // pred_fallthru
      _
    // Predicated region
    $region14: #{tpu_custom_call.1} parent=1 // pred_check
      _
    $region15: #{tpu_custom_call.1} parent=1 // pred_check_branch
      %50 = sbr.rel (0) target = $region17
    $region16: #{tpu_custom_call.1} parent=1 // pred_region
      %52 = dma.done [#allocation7], 256
    $region17: #{tpu_custom_call.1} parent=1 // pred_fallthru
      _
    %s53 = sadd.s32 0, 0
    %p54 = scmp.lt.s32.totalorder %s53, 0
    %s55 = scalar_select %p54, %s53, 0
    %s56 = smul.u32 2, %s55
    %s57 = sadd.s32 0, 0
    %p58 = scmp.lt.s32.totalorder %s57, 0
    %s59 = scalar_select %p58, %s57, 0
    %s60 = smul.u32 2, %s59
    %p61 = scmp.eq.s32.totalorder 0, 0
    // Predicated region
    $region18: #{tpu_custom_call.1} parent=1 // pred_check
      %p62 = pneg %p61
    $region19: #{tpu_custom_call.1} parent=1 // pred_check_branch
      %64 = sbr.rel (%p62) target = $region21
    $region20: #{tpu_custom_call.1} parent=1 // pred_region
      %vm65 = vcmask 7168
      %66 = vst.msk [vmem:[#allocation2] sm:$0xff] %vm65, 0.0
      %67 = vst.msk [vmem:[#allocation3] sm:$0xff] %vm65, 0.0
    $region21: #{tpu_custom_call.1} parent=1 // pred_fallthru
      _
    %v68 = vld [vmem:[#allocation4] sm:$0xff]
    %v69 = vld [vmem:[#allocation4 + $0x8] sm:$0xff]
    %v70 = vld [vmem:[#allocation6] sm:$0xff]
    %v71 = vld [vmem:[#allocation6 + $0x8] sm:$0xff]
    %v72 = vld [vmem:[#allocation2] sm:$0xff]
    %v73 = vmul.f32 %v68, %v70
    %v74 = vmul.f32 %v69, %v71
    %v75 = vadd.f32 %v73, %v74
    %76 = vadd.xlane.f32.xlu0 %v75
    %v77 = vpop.xlane.xlu0 %76
    %v78 = vadd.f32 %v72, %v77
    %vm79 = vcmask 7168
    %80 = vst.msk [vmem:[#allocation2] sm:$0xff] %vm79, %v78
    %v81 = vmul.f32 %v68, %v68
    %v82 = vmul.f32 %v69, %v69
    %v83 = vmul.f32 %v70, %v70
    %v84 = vmul.f32 %v71, %v71
    %v85 = vadd.f32 %v81, %v83
    %v86 = vadd.f32 %v82, %v84
    %v87 = vld [vmem:[#allocation3] sm:$0xff]
    %v88 = vadd.f32 %v85, %v86
    %89 = vadd.xlane.f32.xlu0 %v88
    %v90 = vpop.xlane.xlu0 %89
    %v91 = vadd.f32 %v87, %v90
    %92 = vst.msk [vmem:[#allocation3] sm:$0xff] %vm79, %v91
    // Predicated region
    $region22: #{tpu_custom_call.1} parent=1 // pred_check
      %p93 = pneg %p61
    $region23: #{tpu_custom_call.1} parent=1 // pred_check_branch
      %95 = sbr.rel (%p93) target = $region25
    $region24: #{tpu_custom_call.1} parent=1 // pred_region
      %v96 = vld [vmem:[#allocation2] sm:$0xff]
      %97 = vst.msk [vmem:[%s2] sm:$0xff] %vm79, %v96
      %v98 = vld [vmem:[#allocation3] sm:$0xff]
      %99 = vst.msk [vmem:[%s3] sm:$0xff] %vm79, %v98
    $region25: #{tpu_custom_call.1} parent=1 // pred_fallthru
      _
    // Predicated region
    $region26: #{tpu_custom_call.1} parent=1 // pred_check
      _
    $region27: #{tpu_custom_call.1} parent=1 // pred_check_branch
      %101 = sbr.rel (0) target = $region29
    $region28: #{tpu_custom_call.1} parent=1 // pred_region
      _
    $region29: #{tpu_custom_call.1} parent=1 // pred_fallthru
      _
    // Predicated region
    $region30: #{tpu_custom_call.1} parent=1 // pred_check
      _
    $region31: #{tpu_custom_call.1} parent=1 // pred_check_branch
      %103 = sbr.rel (0) target = $region33
    $region32: #{tpu_custom_call.1} parent=1 // pred_region
      _
    $region33: #{tpu_custom_call.1} parent=1 // pred_fallthru
      _
    // Predicated region
    $region34: #{tpu_custom_call.1} parent=1 // pred_check
      _
    $region35: #{tpu_custom_call.1} parent=1 // pred_check_branch
      %105 = sbr.rel (0) target = $region37
    $region36: #{tpu_custom_call.1} parent=1 // pred_region
      _
    $region37: #{tpu_custom_call.1} parent=1 // pred_fallthru
      _
    // Predicated region
    $region38: #{tpu_custom_call.1} parent=1 // pred_check
      _
    $region39: #{tpu_custom_call.1} parent=1 // pred_check_branch
      %107 = sbr.rel (0) target = $region41
    $region40: #{tpu_custom_call.1} parent=1 // pred_region
      _
    $region41: #{tpu_custom_call.1} parent=1 // pred_fallthru
      _
    %108 = vsyncpa [#allocation5], 1
    %109 = vsyncpa [#allocation7], 1

</llo_original>
